<compile_context>
chip_gen: v5e
topology: v5e:2x2
jax: 0.10.0
libtpu: 0.0.40
codegen_flags: <defaults>
</compile_context>

<pallas_src>
import functools

import jax
import jax.numpy as jnp
import numpy as np
from jax import lax
from jax.experimental import pallas as pl
from jax.experimental.pallas import tpu as pltpu


def _round_up(n, mult):
    return ((n + mult - 1) // mult) * mult


def _cosface_kernel(x_ref, w_ref, lbl_ref, out_ref,
                    m_ref, l_ref, t_ref,
                    *, s, m, block_c, n_valid_last, has_class_pad):
    j = pl.program_id(1)
    nj = pl.num_programs(1)

    neg = jnp.float32(-1e30)   # NaN-free "-inf": exp(neg - m_new) flushes to 0

    # --- first class tile for this batch tile: reset online-softmax state ---
    @pl.when(j == 0)
    def _():
        m_ref[...] = jnp.full(m_ref.shape, neg, jnp.float32)
        l_ref[...] = jnp.zeros_like(l_ref)
        t_ref[...] = jnp.zeros_like(t_ref)

    # cosine similarities: (tb, f) x (f, tc) -> (tb, tc), f32 accumulation.
    # Operands are already L2-normalized bf16; canonical (M,K)x(K,N) layout.
    cosine = jnp.dot(x_ref[...], w_ref[...],
                     preferred_element_type=jnp.float32)

    tb, tc = cosine.shape
    col = lax.broadcasted_iota(jnp.int32, (tb, tc), 1)
    local_lbl = lbl_ref[...] - j * block_c      # (tb, 1): label col in this tile
    hot = col == local_lbl                       # (tb, tc) bool

    logits = jnp.float32(s) * jnp.where(hot, cosine - jnp.float32(m), cosine)

    def accumulate(lg):
        # target logit (the label lands in exactly one class tile)
        t_ref[...] += jnp.sum(jnp.where(hot, lg, 0.0), axis=1, keepdims=True)
        # online softmax
        m_old = m_ref[...]
        m_new = jnp.maximum(m_old, jnp.max(lg, axis=1, keepdims=True))
        alpha = jnp.exp(m_old - m_new)
        p = jnp.exp(lg - m_new)
        l_ref[...] = alpha * l_ref[...] + jnp.sum(p, axis=1, keepdims=True)
        m_ref[...] = m_new

    if has_class_pad:
        # Class padding only exists in the last class tile -> mask only there.
        @pl.when(j < nj - 1)
        def _():
            accumulate(logits)

        @pl.when(j == nj - 1)
        def _():
            accumulate(jnp.where(col < n_valid_last, logits, neg))
    else:
        accumulate(logits)

    # --- last class tile: per-example CE = logsumexp - target logit ----------
    @pl.when(j == nj - 1)
    def _():
        out_ref[...] = m_ref[...] + jnp.log(l_ref[...]) - t_ref[...]


def cosface_loss(x, weights, labels, s=64.0, m=0.35, *,
                 block_b=512, block_c=1024, mxu_dtype=jnp.bfloat16,
                 weight_buffers=2):
    """CosFace loss. x: (B, F), weights: (C, F), labels: (B,) -> scalar f32."""
    B, F = x.shape
    C, F2 = weights.shape
    assert F == F2, "feature dims must match"

    eps_sq = jnp.float32(1e-24)   # (1e-12)^2 -> matches F.normalize eps clamp

    f_pad = _round_up(F, 128)
    # tb: multiple of 16 (bf16 sublane packing); default 512 (256-mult for MXU)
    tb = min(_round_up(block_b, 16), _round_up(B, 16))
    # tc: multiple of 128 (lane-dense weight tile / logits)
    tc = min(_round_up(block_c, 128), _round_up(C, 128))

    itemsize = jnp.dtype(mxu_dtype).itemsize

    def vmem_need(tb_, tc_):
        dbuf = 2 * (tb_ * f_pad + f_pad * tc_) * itemsize   # x + w, double-buf
        dbuf += 4 * (tb_ * 4)                                # labels + out
        interm = 4 * tb_ * tc_ * 4                           # live f32 temps
        scratch = 3 * tb_ * 128 * 4                          # accs (lane-padded)
        return dbuf + interm + scratch

    # Physical-VMEM-aware budget (v7x has only 64 MiB; v5e/v6e have 128 MiB).
    try:
        vmem_cap = pltpu.get_tpu_info().vmem_capacity_bytes
    except Exception:
        vmem_cap = 64 * 1024 * 1024    # conservative fallback (v7x physical)
    budget = (3 * vmem_cap) // 4

    while vmem_need(tb, tc) > budget and tc > 128:
        tc = max(128, _round_up(tc // 2, 128))
    while vmem_need(tb, tc) > budget and tb > 16:
        tb = max(16, _round_up(tb // 2, 16))

    b_pad = _round_up(B, tb)
    c_pad = _round_up(C, tc)
    n_batch_tiles = b_pad // tb
    n_class_tiles = c_pad // tc
    n_valid_last = C - (n_class_tiles - 1) * tc
    has_class_pad = (c_pad != C)

    # --- one fused XLA pass: normalize, cast to MXU dtype, pad, transpose ----
    x32 = x.astype(jnp.float32)
    x_n = (x32 * lax.rsqrt(
        jnp.maximum(jnp.sum(x32 * x32, axis=1, keepdims=True), eps_sq))
           ).astype(mxu_dtype)
    w32 = weights.astype(jnp.float32)
    w_n = (w32 * lax.rsqrt(
        jnp.maximum(jnp.sum(w32 * w32, axis=1, keepdims=True), eps_sq))
           ).astype(mxu_dtype)

    xp = jnp.zeros((b_pad, f_pad), mxu_dtype).at[:B, :F].set(x_n)
    wp = jnp.zeros((f_pad, c_pad), mxu_dtype).at[:F, :C].set(w_n.T)   # (K, N)
    lblp = jnp.zeros((b_pad, 1), jnp.int32).at[:B, 0].set(
        labels.astype(jnp.int32))

    kernel = functools.partial(_cosface_kernel, s=float(s), m=float(m),
                               block_c=tc, n_valid_last=n_valid_last,
                               has_class_pad=has_class_pad)

    w_spec_kwargs = {}
    if weight_buffers != 2:   # e.g. 3 on v5e where the weight DMA is exposed
        w_spec_kwargs["pipeline_mode"] = pl.Buffered(weight_buffers)

    vmem_limit = int(min(budget, max(32 * 1024 * 1024, 2 * vmem_need(tb, tc))))

    per_example = pl.pallas_call(
        kernel,
        out_shape=jax.ShapeDtypeStruct((b_pad, 1), jnp.float32),
        grid_spec=pltpu.PrefetchScalarGridSpec(
            num_scalar_prefetch=0,
            grid=(n_batch_tiles, n_class_tiles),
            in_specs=[
                pl.BlockSpec((tb, f_pad), lambda i, j: (i, 0)),            # x_n
                pl.BlockSpec((f_pad, tc), lambda i, j: (0, j),
                             **w_spec_kwargs),                             # w_n.T
                pl.BlockSpec((tb, 1), lambda i, j: (i, 0)),                # labels
            ],
            out_specs=pl.BlockSpec((tb, 1), lambda i, j: (i, 0)),
            scratch_shapes=[
                pltpu.VMEM((tb, 1), jnp.float32),   # running max
                pltpu.VMEM((tb, 1), jnp.float32),   # running exp-sum
                pltpu.VMEM((tb, 1), jnp.float32),   # target logit
            ]),
        compiler_params=pltpu.CompilerParams(
            dimension_semantics=("parallel", "arbitrary"),
            vmem_limit_bytes=vmem_limit),
    )(xp, wp, lblp)

    # mean cross-entropy over the real (unpadded) rows
    return jnp.sum(per_example[:B, 0]) / jnp.float32(B)


def cosface_loss_ref(x, weights, labels, s=64.0, m=0.35, *, mxu_dtype=None):
    """Pure-JAX reference. mxu_dtype mimics the kernel's matmul operand cast."""
    eps_sq = jnp.float32(1e-24)
    x32 = x.astype(jnp.float32)
    w32 = weights.astype(jnp.float32)
    x_n = x32 * lax.rsqrt(
        jnp.maximum(jnp.sum(x32 * x32, axis=1, keepdims=True), eps_sq))
    w_n = w32 * lax.rsqrt(
        jnp.maximum(jnp.sum(w32 * w32, axis=1, keepdims=True), eps_sq))
    if mxu_dtype is not None:
        x_n = x_n.astype(mxu_dtype)
        w_n = w_n.astype(mxu_dtype)
    cosine = jnp.dot(x_n, w_n.T, preferred_element_type=jnp.float32)
    one_hot = jax.nn.one_hot(labels, weights.shape[0], dtype=jnp.float32)
    logits = jnp.float32(s) * (cosine - one_hot * jnp.float32(m))
    logp = jax.nn.log_softmax(logits, axis=-1)
    return -jnp.mean(jnp.sum(one_hot * logp, axis=-1))


if __name__ == "__main__":
    B = 8        # batch
    NFEAT = 32   # in_features
    NCLS = 300   # out_features (deliberately not a multiple of the class tile)

    key = jax.random.PRNGKey(0)
    kx, kw, kl = jax.random.split(key, 3)

    x = jax.random.normal(kx, (B, NFEAT), dtype=jnp.float32)

    # nn.init.xavier_uniform_ on (nclasses, nfeatures)
    bound = float(np.sqrt(6.0 / (NFEAT + NCLS)))
    weights = jax.random.uniform(kw, (NCLS, NFEAT), dtype=jnp.float32,
                                 minval=-bound, maxval=bound)
    labels = jax.random.randint(kl, (B,), 0, NCLS, dtype=jnp.int32)

    # block_c=128 so the demo exercises several class tiles + class padding.
    loss = cosface_loss(x, weights, labels, block_c=128)
    jax.block_until_ready(loss)

    # Tight check vs a reference using the same bf16 MXU operands.
    ref_bf16 = cosface_loss_ref(x, weights, labels, mxu_dtype=jnp.bfloat16)
    np.testing.assert_allclose(np.asarray(loss), np.asarray(ref_bf16),
                               rtol=1e-3, atol=5e-2)
    # Loose check vs the pure-f32 PyTorch-equivalent semantics (bf16 MXU
    # operands introduce ~1e-3 relative error in cosine, amplified by s=64).
    ref_f32 = cosface_loss_ref(x, weights, labels)
    np.testing.assert_allclose(np.asarray(loss), np.asarray(ref_f32),
                               rtol=2e-2, atol=2e-2)

    print("KERNEL_OK")
</pallas_src>

<mosaic_0001>
module attributes {stable_mosaic.version = 11 : i64} {
  func.func @_cosface_kernel(%arg0: i32, %arg1: i32, %arg2: memref<16x128xbf16, #tpu.memory_space<vmem>>, %arg3: memref<128x128xbf16, #tpu.memory_space<vmem>>, %arg4: memref<16x1xi32, #tpu.memory_space<vmem>>, %arg5: memref<16x1xf32, #tpu.memory_space<vmem>>, %arg6: memref<16x1xf32, #tpu.memory_space<vmem>>, %arg7: memref<16x1xf32, #tpu.memory_space<vmem>>, %arg8: memref<16x1xf32, #tpu.memory_space<vmem>>) attributes {dimension_semantics = [#tpu.dimension_semantics<parallel>, #tpu.dimension_semantics<arbitrary>], iteration_bounds = array<i64: 1, 3>, scalar_prefetch = 0 : i64, scratch_operands = 3 : i64, tpu.core_type = #tpu.core_type<tc>, window_params = [{transform_indices = @transform_0, window_bounds = array<i64: 16, 128>}, {transform_indices = @transform_1, window_bounds = array<i64: 128, 128>}, {transform_indices = @transform_2, window_bounds = array<i64: 16, 1>}, {transform_indices = @transform_3, window_bounds = array<i64: 16, 1>}]} {
    %c0_i32 = arith.constant 0 : i32
    %0 = arith.cmpi eq, %arg1, %c0_i32 : i32
    %1 = arith.extui %0 : i1 to i32
    %cst = arith.constant -1.000000e+30 : f32
    %c0_i32_0 = arith.constant 0 : i32
    %2 = arith.cmpi ne, %1, %c0_i32_0 : i32
    scf.if %2 {
      %27 = vector.broadcast %cst : f32 to vector<16x1xf32>
      %c0_15 = arith.constant 0 : index
      %c0_16 = arith.constant 0 : index
      %28 = vector.load %arg6[%c0_15, %c0_16] : memref<16x1xf32, #tpu.memory_space<vmem>>, vector<16x1xf32>
      tpu.vector_store %arg6[%c0_15, %c0_16], %27 {strides = array<i32>} : memref<16x1xf32, #tpu.memory_space<vmem>>, vector<16x1xf32>,
      %cst_17 = arith.constant 0.000000e+00 : f32
      %29 = vector.broadcast %cst_17 : f32 to vector<16x1xf32>
      %c0_18 = arith.constant 0 : index
      %c0_19 = arith.constant 0 : index
      %30 = vector.load %arg7[%c0_18, %c0_19] : memref<16x1xf32, #tpu.memory_space<vmem>>, vector<16x1xf32>
      tpu.vector_store %arg7[%c0_18, %c0_19], %29 {strides = array<i32>} : memref<16x1xf32, #tpu.memory_space<vmem>>, vector<16x1xf32>,
      %cst_20 = arith.constant 0.000000e+00 : f32
      %31 = vector.broadcast %cst_20 : f32 to vector<16x1xf32>
      %c0_21 = arith.constant 0 : index
      %c0_22 = arith.constant 0 : index
      %32 = vector.load %arg8[%c0_21, %c0_22] : memref<16x1xf32, #tpu.memory_space<vmem>>, vector<16x1xf32>
      tpu.vector_store %arg8[%c0_21, %c0_22], %31 {strides = array<i32>} : memref<16x1xf32, #tpu.memory_space<vmem>>, vector<16x1xf32>,
    } else {
    }
    %c0 = arith.constant 0 : index
    %c0_1 = arith.constant 0 : index
    %3 = vector.load %arg2[%c0, %c0_1] : memref<16x128xbf16, #tpu.memory_space<vmem>>, vector<16x128xbf16>
    %c0_2 = arith.constant 0 : index
    %c0_3 = arith.constant 0 : index
    %4 = vector.load %arg3[%c0_2, %c0_3] : memref<128x128xbf16, #tpu.memory_space<vmem>>, vector<128x128xbf16>
    %cst_4 = arith.constant dense<0.000000e+00> : vector<16x128xf32>
    %5 = tpu.matmul %3, %4, %cst_4 {dimension_numbers = #tpu.dot_dimension_numbers<[1], [0], [0], [1], [0, 0, 1, 1], [], []>} : vector<16x128xbf16>, vector<128x128xbf16>, vector<16x128xf32> -> vector<16x128xf32>
    %6 = tpu.iota {dimensions = array<i32: 1>} : vector<16x128xi32>
    %c0_5 = arith.constant 0 : index
    %c0_6 = arith.constant 0 : index
    %7 = vector.load %arg4[%c0_5, %c0_6] : memref<16x1xi32, #tpu.memory_space<vmem>>, vector<16x1xi32>
    %c128_i32 = arith.constant 128 : i32
    %8 = arith.muli %arg1, %c128_i32 : i32
    %9 = vector.broadcast %8 : i32 to vector<16x1xi32>
    %10 = arith.subi %7, %9 : vector<16x1xi32>
    %11 = vector.broadcast %10 : vector<16x1xi32> to vector<16x128xi32>
    %12 = arith.cmpi eq, %6, %11 : vector<16x128xi32>
    %cst_7 = arith.constant 3.500000e-01 : f32
    %13 = vector.broadcast %cst_7 : f32 to vector<16x128xf32>
    %14 = arith.subf %5, %13 : vector<16x128xf32>
    %15 = arith.select %12, %14, %5 : vector<16x128xi1>, vector<16x128xf32>
    %cst_8 = arith.constant 6.400000e+01 : f32
    %16 = vector.broadcast %cst_8 : f32 to vector<16x128xf32>
    %17 = arith.mulf %16, %15 : vector<16x128xf32>
    %c2_i32 = arith.constant 2 : i32
    %18 = arith.cmpi slt, %arg1, %c2_i32 : i32
    %19 = arith.extui %18 : i1 to i32
    %c0_i32_9 = arith.constant 0 : i32
    %20 = arith.cmpi ne, %19, %c0_i32_9 : i32
    scf.if %20 {
      %c0_15 = arith.constant 0 : index
      %c0_16 = arith.constant 0 : index
      %27 = vector.load %arg8[%c0_15, %c0_16] : memref<16x1xf32, #tpu.memory_space<vmem>>, vector<16x1xf32>
      %cst_17 = arith.constant 0.000000e+00 : f32
      %28 = vector.broadcast %cst_17 : f32 to vector<16x128xf32>
      %29 = arith.select %12, %17, %28 : vector<16x128xi1>, vector<16x128xf32>
      %cst_18 = arith.constant dense<0.000000e+00> : vector<16xf32>
      %30 = vector.multi_reduction <add>, %29, %cst_18 [1] : vector<16x128xf32> to vector<16xf32>
      %31 = vector.shape_cast %30 : vector<16xf32> to vector<16x1xf32>
      %32 = arith.addf %27, %31 : vector<16x1xf32>
      %c0_19 = arith.constant 0 : index
      %c0_20 = arith.constant 0 : index
      %33 = vector.load %arg8[%c0_19, %c0_20] : memref<16x1xf32, #tpu.memory_space<vmem>>, vector<16x1xf32>
      tpu.vector_store %arg8[%c0_19, %c0_20], %32 {strides = array<i32>} : memref<16x1xf32, #tpu.memory_space<vmem>>, vector<16x1xf32>,
      %c0_21 = arith.constant 0 : index
      %c0_22 = arith.constant 0 : index
      %34 = vector.load %arg6[%c0_21, %c0_22] : memref<16x1xf32, #tpu.memory_space<vmem>>, vector<16x1xf32>
      %cst_23 = arith.constant dense<0xFF800000> : vector<16xf32>
      %35 = vector.multi_reduction <maximumf>, %17, %cst_23 [1] : vector<16x128xf32> to vector<16xf32>
      %36 = vector.shape_cast %35 : vector<16xf32> to vector<16x1xf32>
      %37 = arith.maximumf %34, %36 : vector<16x1xf32>
      %38 = arith.subf %34, %37 : vector<16x1xf32>
      %39 = math.exp %38 : vector<16x1xf32>
      %40 = vector.broadcast %37 : vector<16x1xf32> to vector<16x128xf32>
      %41 = arith.subf %17, %40 : vector<16x128xf32>
      %42 = math.exp %41 : vector<16x128xf32>
      %c0_24 = arith.constant 0 : index
      %c0_25 = arith.constant 0 : index
      %43 = vector.load %arg7[%c0_24, %c0_25] : memref<16x1xf32, #tpu.memory_space<vmem>>, vector<16x1xf32>
      %44 = arith.mulf %39, %43 : vector<16x1xf32>
      %cst_26 = arith.constant dense<0.000000e+00> : vector<16xf32>
      %45 = vector.multi_reduction <add>, %42, %cst_26 [1] : vector<16x128xf32> to vector<16xf32>
      %46 = vector.shape_cast %45 : vector<16xf32> to vector<16x1xf32>
      %47 = arith.addf %44, %46 : vector<16x1xf32>
      %c0_27 = arith.constant 0 : index
      %c0_28 = arith.constant 0 : index
      %48 = vector.load %arg7[%c0_27, %c0_28] : memref<16x1xf32, #tpu.memory_space<vmem>>, vector<16x1xf32>
      tpu.vector_store %arg7[%c0_27, %c0_28], %47 {strides = array<i32>} : memref<16x1xf32, #tpu.memory_space<vmem>>, vector<16x1xf32>,
      %c0_29 = arith.constant 0 : index
      %c0_30 = arith.constant 0 : index
      %49 = vector.load %arg6[%c0_29, %c0_30] : memref<16x1xf32, #tpu.memory_space<vmem>>, vector<16x1xf32>
      tpu.vector_store %arg6[%c0_29, %c0_30], %37 {strides = array<i32>} : memref<16x1xf32, #tpu.memory_space<vmem>>, vector<16x1xf32>,
    } else {
    }
    %c2_i32_10 = arith.constant 2 : i32
    %21 = arith.cmpi eq, %arg1, %c2_i32_10 : i32
    %22 = arith.extui %21 : i1 to i32
    %cst_11 = arith.constant -1.000000e+30 : f32
    %c0_i32_12 = arith.constant 0 : i32
    %23 = arith.cmpi ne, %22, %c0_i32_12 : i32
    scf.if %23 {
      %c44_i32 = arith.constant 44 : i32
      %27 = vector.broadcast %c44_i32 : i32 to vector<16x128xi32>
      %28 = arith.cmpi slt, %6, %27 : vector<16x128xi32>
      %29 = vector.broadcast %cst_11 : f32 to vector<16x128xf32>
      %30 = arith.select %28, %17, %29 : vector<16x128xi1>, vector<16x128xf32>
      %c0_15 = arith.constant 0 : index
      %c0_16 = arith.constant 0 : index
      %31 = vector.load %arg8[%c0_15, %c0_16] : memref<16x1xf32, #tpu.memory_space<vmem>>, vector<16x1xf32>
      %cst_17 = arith.constant 0.000000e+00 : f32
      %32 = vector.broadcast %cst_17 : f32 to vector<16x128xf32>
      %33 = arith.select %12, %30, %32 : vector<16x128xi1>, vector<16x128xf32>
      %cst_18 = arith.constant dense<0.000000e+00> : vector<16xf32>
      %34 = vector.multi_reduction <add>, %33, %cst_18 [1] : vector<16x128xf32> to vector<16xf32>
      %35 = vector.shape_cast %34 : vector<16xf32> to vector<16x1xf32>
      %36 = arith.addf %31, %35 : vector<16x1xf32>
      %c0_19 = arith.constant 0 : index
      %c0_20 = arith.constant 0 : index
      %37 = vector.load %arg8[%c0_19, %c0_20] : memref<16x1xf32, #tpu.memory_space<vmem>>, vector<16x1xf32>
      tpu.vector_store %arg8[%c0_19, %c0_20], %36 {strides = array<i32>} : memref<16x1xf32, #tpu.memory_space<vmem>>, vector<16x1xf32>,
      %c0_21 = arith.constant 0 : index
      %c0_22 = arith.constant 0 : index
      %38 = vector.load %arg6[%c0_21, %c0_22] : memref<16x1xf32, #tpu.memory_space<vmem>>, vector<16x1xf32>
      %cst_23 = arith.constant dense<0xFF800000> : vector<16xf32>
      %39 = vector.multi_reduction <maximumf>, %30, %cst_23 [1] : vector<16x128xf32> to vector<16xf32>
      %40 = vector.shape_cast %39 : vector<16xf32> to vector<16x1xf32>
      %41 = arith.maximumf %38, %40 : vector<16x1xf32>
      %42 = arith.subf %38, %41 : vector<16x1xf32>
      %43 = math.exp %42 : vector<16x1xf32>
      %44 = vector.broadcast %41 : vector<16x1xf32> to vector<16x128xf32>
      %45 = arith.subf %30, %44 : vector<16x128xf32>
      %46 = math.exp %45 : vector<16x128xf32>
      %c0_24 = arith.constant 0 : index
      %c0_25 = arith.constant 0 : index
      %47 = vector.load %arg7[%c0_24, %c0_25] : memref<16x1xf32, #tpu.memory_space<vmem>>, vector<16x1xf32>
      %48 = arith.mulf %43, %47 : vector<16x1xf32>
      %cst_26 = arith.constant dense<0.000000e+00> : vector<16xf32>
      %49 = vector.multi_reduction <add>, %46, %cst_26 [1] : vector<16x128xf32> to vector<16xf32>
      %50 = vector.shape_cast %49 : vector<16xf32> to vector<16x1xf32>
      %51 = arith.addf %48, %50 : vector<16x1xf32>
      %c0_27 = arith.constant 0 : index
      %c0_28 = arith.constant 0 : index
      %52 = vector.load %arg7[%c0_27, %c0_28] : memref<16x1xf32, #tpu.memory_space<vmem>>, vector<16x1xf32>
      tpu.vector_store %arg7[%c0_27, %c0_28], %51 {strides = array<i32>} : memref<16x1xf32, #tpu.memory_space<vmem>>, vector<16x1xf32>,
      %c0_29 = arith.constant 0 : index
      %c0_30 = arith.constant 0 : index
      %53 = vector.load %arg6[%c0_29, %c0_30] : memref<16x1xf32, #tpu.memory_space<vmem>>, vector<16x1xf32>
      tpu.vector_store %arg6[%c0_29, %c0_30], %41 {strides = array<i32>} : memref<16x1xf32, #tpu.memory_space<vmem>>, vector<16x1xf32>,
    } else {
    }
    %c2_i32_13 = arith.constant 2 : i32
    %24 = arith.cmpi eq, %arg1, %c2_i32_13 : i32
    %25 = arith.extui %24 : i1 to i32
    %c0_i32_14 = arith.constant 0 : i32
    %26 = arith.cmpi ne, %25, %c0_i32_14 : i32
    scf.if %26 {
      %c0_15 = arith.constant 0 : index
      %c0_16 = arith.constant 0 : index
      %27 = vector.load %arg6[%c0_15, %c0_16] : memref<16x1xf32, #tpu.memory_space<vmem>>, vector<16x1xf32>
      %c0_17 = arith.constant 0 : index
      %c0_18 = arith.constant 0 : index
      %28 = vector.load %arg7[%c0_17, %c0_18] : memref<16x1xf32, #tpu.memory_space<vmem>>, vector<16x1xf32>
      %29 = math.log %28 : vector<16x1xf32>
      %30 = arith.addf %27, %29 : vector<16x1xf32>
      %c0_19 = arith.constant 0 : index
      %c0_20 = arith.constant 0 : index
      %31 = vector.load %arg8[%c0_19, %c0_20] : memref<16x1xf32, #tpu.memory_space<vmem>>, vector<16x1xf32>
      %32 = arith.subf %30, %31 : vector<16x1xf32>
      %c0_21 = arith.constant 0 : index
      %c0_22 = arith.constant 0 : index
      %33 = vector.load %arg5[%c0_21, %c0_22] : memref<16x1xf32, #tpu.memory_space<vmem>>, vector<16x1xf32>
      tpu.vector_store %arg5[%c0_21, %c0_22], %32 {strides = array<i32>} : memref<16x1xf32, #tpu.memory_space<vmem>>, vector<16x1xf32>,
    } else {
    }
    return
  }
  func.func @transform_0(%arg0: i32, %arg1: i32) -> (i32, i32) {
    %c0_i32 = arith.constant 0 : i32
    %c0_i32_0 = arith.constant 0 : i32
    return %arg0, %c0_i32 : i32, i32
  }
  func.func @transform_1(%arg0: i32, %arg1: i32) -> (i32, i32) {
    %c0_i32 = arith.constant 0 : i32
    %c0_i32_0 = arith.constant 0 : i32
    return %c0_i32, %arg1 : i32, i32
  }
  func.func @transform_2(%arg0: i32, %arg1: i32) -> (i32, i32) {
    %c0_i32 = arith.constant 0 : i32
    %c0_i32_0 = arith.constant 0 : i32
    return %arg0, %c0_i32 : i32, i32
  }
  func.func @transform_3(%arg0: i32, %arg1: i32) -> (i32, i32) {
    %c0_i32 = arith.constant 0 : i32
    %c0_i32_0 = arith.constant 0 : i32
    return %arg0, %c0_i32 : i32, i32
  }
}

</mosaic_0001>

<llo_original>
// kernel: tpu_custom_call.1
$region0: #{tpu_custom_call.1}
  #allocation0 [shape = 'u32[]', space=smem, size = 0x4, offset = 0x4, fixed_abs, tag = 'smem constant byte address 0x4 - core index']
  #allocation1 [shape = 'u32[72,128]{1,0:T(1,128)}', space=vmem, size = 0x9000, scoped, tag = 'internal scratch']
  #allocation2 [shape = 'f32[16,1]{1,0:T(8,128)}', space=vmem, size = 0x2000, scoped, tag = 'scratch operand']
  #allocation3 [shape = 'f32[16,1]{1,0:T(8,128)}', space=vmem, size = 0x2000, scoped, tag = 'scratch operand']
  #allocation4 [shape = 'f32[16,1]{1,0:T(8,128)}', space=vmem, size = 0x2000, scoped, tag = 'scratch operand']
  %s0 = inlined_call_operand.vmem [shape: bf16[16,128], index: 0, kind: input, shape index: {}]
  %s1 = inlined_call_operand.hbm [shape: bf16[128,384], index: 1, kind: input, shape index: {}]
  %s2 = inlined_call_operand.vmem [shape: s32[16,1], index: 2, kind: input, shape index: {}]
  %s3 = inlined_call_operand.vmem [shape: f32[16,1], index: 3, kind: output, shape index: {}]
  %s4 = sld [smem:[#allocation0]]
  $region61: #{tpu_custom_call.1} parent=0
    _
  %s6 = ssub.s32 1, %s4
  %s7 = scalar_select 0, %s6, %s4
  $region1: #{tpu_custom_call.1} parent=0
    #allocation5 [shape = 'u8[65536]{0}', space=vmem, size = 0x10000, scoped, tag = 'input window, operand 1']
    #allocation6 [shape = 's32[2]{0}', space=sflag, size = 0x8, scoped, tag = 'scoped memory for tpu_custom_call.1']
    %8 = vsyncpa [#allocation6], 0
    %s9 = scalar_lea.sflag [#allocation6], 1
    %10 = vsyncpa %s9, 0
    loop: start=0, step=1, limit=5
    $region2: #{tpu_custom_call.1} parent=1 // loop_pre_header
      _
    $region3: #{tpu_custom_call.1} parent=1 // loop_header
      %s12 = sphi 0, %s16
      %p13 = scmp.ge.s32.totalorder %s12, 5
      %s19 = sphi 0, %s31
      %s20 = sphi 0, %s27
      %s21 = sphi 0, %s19
      %s22 = sphi 0, %s20
      %s23 = sphi 0, %s21
      %s24 = sphi 0, %s22
      %s34 = sphi 0, %s36
      %s37 = sphi 0, %s34
      %s38 = sphi 0, %s37
      %s54 = sphi 0, %s38
      %s60 = sphi 0, %s62
      %s63 = sphi 0, %s60
      %s64 = sphi 0, %s63
      %s80 = sphi 0, %s64
      %s86 = sphi 0, %s88
      %s89 = sphi 0, %s86
      %s90 = sphi 0, %s89
      %s106 = sphi 0, %s90
      %s112 = sphi 0, %s114
      %s115 = sphi 0, %s112
      %s116 = sphi 0, %s115
      %s132 = sphi 0, %s116
    $region4: #{tpu_custom_call.1} parent=1 // loop_header_branch
      %15 = sbr.rel (%p13) target = $region8
    $region5: #{tpu_custom_call.1} parent=1 // loop_body
      %s17 = ssub.s32 %s12, 1
      %s18 = ssub.s32 %s12, 2
      %s25 = sadd.s32 1, %s20
      %p26 = scmp.ge.s32.totalorder %s25, 3
      %s27 = scalar_select %p26, 0, %s25
      %s28 = sadd.s32 1, %s19
      %s29 = scalar_select %p26, %s28, %s19
      %p30 = scmp.ge.s32.totalorder %s29, 1
      %s31 = scalar_select %p30, 0, %s29
      %s32 = ssub.s32 %s19, %s31
      %p33 = scmp.eq.s32.totalorder %s32, 0
      %s35 = sadd.s32 %s34, 1
      %s36 = scalar_select %p33, %s34, %s35
      %p39 = pneg %p33
      %p40 = scmp.eq.s32.totalorder %s12, 2
      %p41 = por %p39, %p40
      %p42 = scmp.ne.s32.totalorder %s34, %s37
      %p43 = scmp.eq.s32.totalorder %s12, 0
      %p44 = por %p42, %p43
      %p45 = scmp.ne.s32.totalorder %s34, %s37
      %p46 = scmp.eq.s32.totalorder %s17, 2
      %p47 = por %p45, %p46
      %p48 = scmp.ne.s32.totalorder %s37, %s38
      %p49 = scmp.eq.s32.totalorder %s17, 0
      %p50 = por %p48, %p49
      %p51 = scmp.ne.s32.totalorder %s37, %s38
      %p52 = scmp.eq.s32.totalorder %s18, 2
      %p53 = por %p51, %p52
      %p55 = scmp.ne.s32.totalorder %s38, %s54
      %p56 = scmp.eq.s32.totalorder %s18, 0
      %p57 = por %p55, %p56
      %s58 = ssub.s32 %s20, %s27
      %p59 = scmp.eq.s32.totalorder %s58, 0
      %s61 = sadd.s32 %s60, 1
      %s62 = scalar_select %p59, %s60, %s61
      %p65 = pneg %p59
      %p66 = scmp.eq.s32.totalorder %s12, 2
      %p67 = por %p65, %p66
      %p68 = scmp.ne.s32.totalorder %s60, %s63
      %p69 = scmp.eq.s32.totalorder %s12, 0
      %p70 = por %p68, %p69
      %p71 = scmp.ne.s32.totalorder %s60, %s63
      %p72 = scmp.eq.s32.totalorder %s17, 2
      %p73 = por %p71, %p72
      %p74 = scmp.ne.s32.totalorder %s63, %s64
      %p75 = scmp.eq.s32.totalorder %s17, 0
      %p76 = por %p74, %p75
      %p77 = scmp.ne.s32.totalorder %s63, %s64
      %p78 = scmp.eq.s32.totalorder %s18, 2
      %p79 = por %p77, %p78
      %p81 = scmp.ne.s32.totalorder %s64, %s80
      %p82 = scmp.eq.s32.totalorder %s18, 0
      %p83 = por %p81, %p82
      %s84 = ssub.s32 %s19, %s31
      %p85 = scmp.eq.s32.totalorder %s84, 0
      %s87 = sadd.s32 %s86, 1
      %s88 = scalar_select %p85, %s86, %s87
      %p91 = pneg %p85
      %p92 = scmp.eq.s32.totalorder %s12, 2
      %p93 = por %p91, %p92
      %p94 = scmp.ne.s32.totalorder %s86, %s89
      %p95 = scmp.eq.s32.totalorder %s12, 0
      %p96 = por %p94, %p95
      %p97 = scmp.ne.s32.totalorder %s86, %s89
      %p98 = scmp.eq.s32.totalorder %s17, 2
      %p99 = por %p97, %p98
      %p100 = scmp.ne.s32.totalorder %s89, %s90
      %p101 = scmp.eq.s32.totalorder %s17, 0
      %p102 = por %p100, %p101
      %p103 = scmp.ne.s32.totalorder %s89, %s90
      %p104 = scmp.eq.s32.totalorder %s18, 2
      %p105 = por %p103, %p104
      %p107 = scmp.ne.s32.totalorder %s90, %s106
      %p108 = scmp.eq.s32.totalorder %s18, 0
      %p109 = por %p107, %p108
      %s110 = ssub.s32 %s19, %s31
      %p111 = scmp.eq.s32.totalorder %s110, 0
      %s113 = sadd.s32 %s112, 1
      %s114 = scalar_select %p111, %s112, %s113
      %p117 = pneg %p111
      %p118 = scmp.eq.s32.totalorder %s12, 2
      %p119 = por %p117, %p118
      %p120 = scmp.ne.s32.totalorder %s112, %s115
      %p121 = scmp.eq.s32.totalorder %s12, 0
      %p122 = por %p120, %p121
      %p123 = scmp.ne.s32.totalorder %s112, %s115
      %p124 = scmp.eq.s32.totalorder %s17, 2
      %p125 = por %p123, %p124
      %p126 = scmp.ne.s32.totalorder %s115, %s116
      %p127 = scmp.eq.s32.totalorder %s17, 0
      %p128 = por %p126, %p127
      %p129 = scmp.ne.s32.totalorder %s115, %s116
      %p130 = scmp.eq.s32.totalorder %s18, 2
      %p131 = por %p129, %p130
      %p133 = scmp.ne.s32.totalorder %s116, %s132
      %p134 = scmp.eq.s32.totalorder %s18, 0
      %p135 = por %p133, %p134
      %p136 = scmp.le.s32.totalorder 1, %s12
      %p137 = scmp.lt.s32.totalorder %s12, 4
      %p138 = pnand %p136, %p137
      %p139 = pneg %p138
      // Predicated region
      $region9: #{tpu_custom_call.1} parent=5 // pred_check
        _
      $region10: #{tpu_custom_call.1} parent=5 // pred_check_branch
        %141 = sbr.rel (%p138) target = $region12
      $region11: #{tpu_custom_call.1} parent=5 // pred_region
        %s142 = ssub.s32 %s12, 1
        // Predicated region
        $region13: #{tpu_custom_call.1} parent=11 // pred_check
          %p143 = pneg %p50
        $region14: #{tpu_custom_call.1} parent=11 // pred_check_branch
          %145 = sbr.rel (%p143) target = $region16
        $region15: #{tpu_custom_call.1} parent=11 // pred_region
          %s146 = smul.u32 2, %s21
          %p147 = scmp.lt.s32.totalorder %s146, 1
          %s148 = scalar_select %p147, %s146, 1
          %s149 = smul.addr %s148, 4
          %s150 = scalar_lea.vmem %s0, %s149
          %s151 = smul.u32 2, %s21
        $region16: #{tpu_custom_call.1} parent=11 // pred_fallthru
          _
        // Predicated region
        $region17: #{tpu_custom_call.1} parent=11 // pred_check
          %p152 = pneg %p102
        $region18: #{tpu_custom_call.1} parent=11 // pred_check_branch
          %154 = sbr.rel (%p152) target = $region20
        $region19: #{tpu_custom_call.1} parent=11 // pred_region
          %s155 = smul.u32 2, %s21
          %p156 = scmp.lt.s32.totalorder %s155, 1
          %s157 = scalar_select %p156, %s155, 1
          %s158 = smul.addr %s157, 8
          %s159 = scalar_lea.vmem %s2, %s158
          %s160 = smul.u32 2, %s21
        $region20: #{tpu_custom_call.1} parent=11 // pred_fallthru
          _
      $region12: #{tpu_custom_call.1} parent=5 // pred_fallthru
        _
      %p161 = scmp.lt.s32.totalorder %s12, 3
      // Predicated region
      $region21: #{tpu_custom_call.1} parent=5 // pred_check
        %p162 = pneg %p161
      $region22: #{tpu_custom_call.1} parent=5 // pred_check_branch
        %164 = sbr.rel (%p162) target = $region24
      $region23: #{tpu_custom_call.1} parent=5 // pred_region
        // Predicated region
        $region25: #{tpu_custom_call.1} parent=23 // pred_check
          %p165 = pneg %p70
        $region26: #{tpu_custom_call.1} parent=23 // pred_check_branch
          %167 = sbr.rel (%p165) target = $region28
        $region27: #{tpu_custom_call.1} parent=23 // pred_region
          %s168 = sand.u32 %s60, 1
          %s169 = scalar_lea.sflag [#allocation6], %s168
          %s170 = sand.u32 %s60, 1
          %s171 = smul.addr %s170, 64
          %s172 = scalar_lea.vmem [#allocation5], %s171
          %174 = vsyncadd %s169, 0
          %s175 = smul.addr %s20, 4
          %s176 = scalar_lea.hbm %s1, %s175
          %s177 = sshll.u32 %s176, 4
          %s178 = int_to_ptr.hbm [resolvable:$true] %s177
          %s179 = sshll.u32 %s172, 4
          %s180 = int_to_ptr.vmem [resolvable:$true] %s179
          %185 = dma.hbm_to_vmem [thread:$0]  %s178, 1024, %s180, %s169, 192, 64, 4
        $region28: #{tpu_custom_call.1} parent=23 // pred_fallthru
          _
      $region24: #{tpu_custom_call.1} parent=5 // pred_fallthru
        _
      %p186 = scmp.le.s32.totalorder 1, %s12
      %p187 = scmp.lt.s32.totalorder %s12, 4
      %p188 = pnand %p186, %p187
      %p189 = pneg %p188
      // Predicated region
      $region29: #{tpu_custom_call.1} parent=5 // pred_check
        _
      $region30: #{tpu_custom_call.1} parent=5 // pred_check_branch
        %191 = sbr.rel (%p188) target = $region32
      $region31: #{tpu_custom_call.1} parent=5 // pred_region
        %s192 = ssub.s32 %s12, 1
        %s193 = sand.u32 %s63, 1
        %s194 = scalar_lea.sflag [#allocation6], %s193
        %s195 = sand.u32 %s63, 1
        %s196 = smul.addr %s195, 64
        %s197 = scalar_lea.vmem [#allocation5], %s196
        // Predicated region
        $region33: #{tpu_custom_call.1} parent=31 // pred_check
          %p198 = pneg %p76
        $region34: #{tpu_custom_call.1} parent=31 // pred_check_branch
          %200 = sbr.rel (%p198) target = $region36
        $region35: #{tpu_custom_call.1} parent=31 // pred_region
          %202 = dma.done %s194, 1024
        $region36: #{tpu_custom_call.1} parent=31 // pred_fallthru
          _
        %s203 = smul.u32 2, %s21
        %p204 = scmp.lt.s32.totalorder %s203, 1
        %s205 = scalar_select %p204, %s203, 1
        %s206 = smul.addr %s205, 4
        %s207 = scalar_lea.vmem %s0, %s206
        %p208 = pneg %p50
        %p209 = pneg %p47
        %s210 = sand.u32 %s63, 1
        %s211 = scalar_lea.sflag [#allocation6], %s210
        %s212 = sand.u32 %s63, 1
        %s213 = smul.addr %s212, 64
        %s214 = scalar_lea.vmem [#allocation5], %s213
        %p215 = pneg %p76
        %p216 = pneg %p73
        %s217 = smul.u32 2, %s21
        %p218 = scmp.lt.s32.totalorder %s217, 1
        %s219 = scalar_select %p218, %s217, 1
        %s220 = smul.addr %s219, 8
        %s221 = scalar_lea.vmem %s2, %s220
        %p222 = pneg %p102
        %p223 = pneg %p99
        %p224 = pneg %p128
        %p225 = pneg %p125
        %s226 = smul.u32 2, %s21
        %p227 = scmp.lt.s32.totalorder %s226, 1
        %s228 = scalar_select %p227, %s226, 1
        %s229 = smul.addr %s228, 8
        %s230 = scalar_lea.vmem %s3, %s229
        %s231 = smul.u32 2, %s21
        %p232 = scmp.lt.s32.totalorder %s231, 1
        %s233 = scalar_select %p232, %s231, 1
        %s234 = smul.addr %s233, 4
        %s235 = scalar_lea.vmem %s0, %s234
        %s236 = smul.u32 2, %s21
        %s237 = smul.u32 2, %s21
        %p238 = scmp.lt.s32.totalorder %s237, 1
        %s239 = scalar_select %p238, %s237, 1
        %s240 = smul.addr %s239, 8
        %s241 = scalar_lea.vmem %s2, %s240
        %s242 = smul.u32 2, %s21
        %s243 = smul.u32 2, %s21
        %p244 = scmp.lt.s32.totalorder %s243, 1
        %s245 = scalar_select %p244, %s243, 1
        %s246 = smul.addr %s245, 8
        %s247 = scalar_lea.vmem %s3, %s246
        %s248 = smul.u32 2, %s21
        %p249 = scmp.eq.s32.totalorder %s22, 0
        // Predicated region
        $region37: #{tpu_custom_call.1} parent=31 // pred_check
          %p250 = pneg %p249
        $region38: #{tpu_custom_call.1} parent=31 // pred_check_branch
          %252 = sbr.rel (%p250) target = $region40
        $region39: #{tpu_custom_call.1} parent=31 // pred_region
          %vm253 = vcmask 7168
          %254 = vst.msk [vmem:[#allocation2] sm:$0xff] %vm253, -1e+30
          %255 = vst.msk [vmem:[#allocation2 + $0x8] sm:$0xff] %vm253, -1e+30
          %256 = vst.msk [vmem:[#allocation3] sm:$0xff] %vm253, 0.0
          %257 = vst.msk [vmem:[#allocation3 + $0x8] sm:$0xff] %vm253, 0.0
          %258 = vst.msk [vmem:[#allocation4] sm:$0xff] %vm253, 0.0
          %259 = vst.msk [vmem:[#allocation4 + $0x8] sm:$0xff] %vm253, 0.0
        $region40: #{tpu_custom_call.1} parent=31 // pred_fallthru
          _
        %v260 = vld [vmem:[%s235] sm:$0xf]
        %v261 = vld [vmem:[%s235 + $0x4] sm:$0xf]
        %v262 = vld [vmem:[%s197] sm:$0xf]
        %v263 = vld [vmem:[%s197 + $0x4] sm:$0xf]
        %v264 = vld [vmem:[%s197 + $0x8] sm:$0xf]
        %v265 = vld [vmem:[%s197 + $0xc] sm:$0xf]
        %v266 = vld [vmem:[%s197 + $0x10] sm:$0xf]
        %v267 = vld [vmem:[%s197 + $0x14] sm:$0xf]
        %v268 = vld [vmem:[%s197 + $0x18] sm:$0xf]
        %v269 = vld [vmem:[%s197 + $0x1c] sm:$0xf]
        %v270 = vld [vmem:[%s197 + $0x20] sm:$0xf]
        %v271 = vld [vmem:[%s197 + $0x24] sm:$0xf]
        %v272 = vld [vmem:[%s197 + $0x28] sm:$0xf]
        %v273 = vld [vmem:[%s197 + $0x2c] sm:$0xf]
        %v274 = vld [vmem:[%s197 + $0x30] sm:$0xf]
        %v275 = vld [vmem:[%s197 + $0x34] sm:$0xf]
        %v276 = vld [vmem:[%s197 + $0x38] sm:$0xf]
        %v277 = vld [vmem:[%s197 + $0x3c] sm:$0xf]
        %v280 = vunpack.c.l.b16 %v260
        %v281 = vunpack.c.l.b16 %v261
        %v282 = vpack.c.b16 %v281, %v280
        %v300 = vunpack.c.l.b16 %v262
        %v301 = vunpack.c.l.b16 %v263
        %v302 = vunpack.c.l.b16 %v264
        %v303 = vunpack.c.l.b16 %v265
        %v304 = vunpack.c.l.b16 %v266
        %v305 = vunpack.c.l.b16 %v267
        %v306 = vunpack.c.l.b16 %v268
        %v307 = vunpack.c.l.b16 %v269
        %v308 = vunpack.c.l.b16 %v270
        %v309 = vunpack.c.l.b16 %v271
        %v310 = vunpack.c.l.b16 %v272
        %v311 = vunpack.c.l.b16 %v273
        %v312 = vunpack.c.l.b16 %v274
        %v313 = vunpack.c.l.b16 %v275
        %v314 = vunpack.c.l.b16 %v276
        %v315 = vunpack.c.l.b16 %v277
        %v316 = vpack.c.b16 %v301, %v300
        %v317 = vpack.c.b16 %v303, %v302
        %v318 = vpack.c.b16 %v305, %v304
        %v319 = vpack.c.b16 %v307, %v306
        %v320 = vpack.c.b16 %v309, %v308
        %v321 = vpack.c.b16 %v311, %v310
        %v322 = vpack.c.b16 %v313, %v312
        %v323 = vpack.c.b16 %v315, %v314
        %332 = vmatpush.bf16.msra.mxu0 %v323
        %333 = vmatpush.bf16.msra.mxu0 %v322
        %334 = vmatpush.bf16.msra.mxu0 %v321
        %335 = vmatpush.bf16.msra.mxu0 %v320
        %336 = vmatpush.bf16.msra.mxu0 %v319
        %337 = vmatpush.bf16.msra.mxu0 %v318
        %338 = vmatpush.bf16.msra.mxu0 %v317
        %339 = vmatpush.bf16.msra.mxu0 %v316
        %340 = vmatmul.bf16.gmra.mxu0 %v282
        %v341 = vpop.f32.mrf.mxu0
        %v342 = vadd.f32 0.0, %v341
        %v343 = vpop.f32.mrf.mxu0
        %v344 = vadd.f32 0.0, %v343
        %345 = vdwg.mxu0
        %v346 = vlaneseq
        %v347 = vand.u32 %v346, 127
        %v348 = vld [vmem:[%s241] sm:$0xff]
        %v349 = vld [vmem:[%s241 + $0x8] sm:$0xff]
        %s350 = smul.u32 %s22, 128
        %v351 = vstv %s350
        %v352 = vsub.s32 %v348, %v351
        %v353 = vsub.s32 %v349, %v351
        %354 = vset.pattern.permute.xlu0 0
        %355 = vperm.xlu0 %354, %v352
        %v356 = vpop.permute.xlu0 %355
        %357 = vset.pattern.permute.xlu0 0
        %358 = vperm.xlu0 %357, %v353
        %v359 = vpop.permute.xlu0 %358
        %vm360 = vcmp.eq.s32.totalorder %v347, %v356
        %vm361 = vcmp.eq.s32.totalorder %v347, %v359
        %v362 = vsub.f32 %v342, 0.35
        %v363 = vsub.f32 %v344, 0.35
        %v364 = vsel %vm360, %v362, %v342
        %v365 = vsel %vm361, %v363, %v344
        %v366 = vmul.f32 %v364, 64.0
        %v367 = vmul.f32 %v365, 64.0
        %p368 = scmp.lt.s32.totalorder %s22, 2
        // Predicated region
        $region41: #{tpu_custom_call.1} parent=31 // pred_check
          %p369 = pneg %p368
        $region42: #{tpu_custom_call.1} parent=31 // pred_check_branch
          %371 = sbr.rel (%p369) target = $region44
        $region43: #{tpu_custom_call.1} parent=31 // pred_region
          %v372 = vld [vmem:[#allocation4] sm:$0xff]
          %v373 = vld [vmem:[#allocation4 + $0x8] sm:$0xff]
          %v374 = vsel %vm360, %v366, 0.0
          %v375 = vsel %vm361, %v367, 0.0
          %376 = vadd.xlane.f32.xlu0 %v374
          %v377 = vpop.xlane.xlu0 %376
          %378 = vadd.xlane.f32.xlu0 %v375
          %v379 = vpop.xlane.xlu0 %378
          %v380 = vadd.f32 %v372, %v377
          %v381 = vadd.f32 %v373, %v379
          %vm382 = vcmask 7168
          %383 = vst.msk [vmem:[#allocation4] sm:$0xff] %vm382, %v380
          %384 = vst.msk [vmem:[#allocation4 + $0x8] sm:$0xff] %vm382, %v381
          %v385 = vld [vmem:[#allocation2] sm:$0xff]
          %v386 = vld [vmem:[#allocation2 + $0x8] sm:$0xff]
          %387 = vmax.xlane.f32.xlu0 %v366
          %v388 = vpop.xlane.xlu0 %387
          %389 = vmax.xlane.f32.xlu0 %v367
          %v390 = vpop.xlane.xlu0 %389
          %v391 = vmax.f32 %v385, %v388
          %v392 = vmax.f32 %v386, %v390
          %v393 = vsub.f32 %v385, %v391
          %v394 = vsub.f32 %v386, %v392
          %v395 = vmul.f32 %v393, 1.442695
          %v396 = vpow.pop %v395
          %v397 = vmul.f32 %v394, 1.442695
          %v398 = vpow.pop %v397
          %400 = vset.pattern.permute.xlu0 0
          %401 = vperm.xlu0 %400, %v391
          %v402 = vpop.permute.xlu0 %401
          %405 = vset.pattern.permute.xlu0 0
          %406 = vperm.xlu0 %405, %v392
          %v407 = vpop.permute.xlu0 %406
          %v409 = vsub.f32 %v366, %v402
          %v410 = vsub.f32 %v367, %v407
          %v411 = vmul.f32 %v409, 1.442695
          %v412 = vpow.pop %v411
          %v413 = vmul.f32 %v410, 1.442695
          %v414 = vpow.pop %v413
          %v415 = vld [vmem:[#allocation3] sm:$0xff]
          %v416 = vld [vmem:[#allocation3 + $0x8] sm:$0xff]
          %v417 = vmul.f32 %v396, %v415
          %v418 = vmul.f32 %v398, %v416
          %419 = vadd.xlane.f32.xlu0 %v412
          %v420 = vpop.xlane.xlu0 %419
          %421 = vadd.xlane.f32.xlu0 %v414
          %v422 = vpop.xlane.xlu0 %421
          %v423 = vadd.f32 %v417, %v420
          %v424 = vadd.f32 %v418, %v422
          %425 = vst.msk [vmem:[#allocation3] sm:$0xff] %vm382, %v423
          %426 = vst.msk [vmem:[#allocation3 + $0x8] sm:$0xff] %vm382, %v424
          %427 = vst.msk [vmem:[#allocation2] sm:$0xff] %vm382, %v391
          %428 = vst.msk [vmem:[#allocation2 + $0x8] sm:$0xff] %vm382, %v392
        $region44: #{tpu_custom_call.1} parent=31 // pred_fallthru
          _
        %p429 = scmp.eq.s32.totalorder %s22, 2
        // Predicated region
        $region45: #{tpu_custom_call.1} parent=31 // pred_check
          %p430 = pneg %p429
        $region46: #{tpu_custom_call.1} parent=31 // pred_check_branch
          %432 = sbr.rel (%p430) target = $region48
        $region47: #{tpu_custom_call.1} parent=31 // pred_region
          %vm433 = vcmp.lt.s32.totalorder %v347, 44
          %v434 = vsel %vm433, %v366, -1e+30
          %v435 = vsel %vm433, %v367, -1e+30
          %v436 = vld [vmem:[#allocation4] sm:$0xff]
          %v437 = vld [vmem:[#allocation4 + $0x8] sm:$0xff]
          %v438 = vsel %vm360, %v434, 0.0
          %v439 = vsel %vm361, %v435, 0.0
          %440 = vadd.xlane.f32.xlu0 %v438
          %v441 = vpop.xlane.xlu0 %440
          %442 = vadd.xlane.f32.xlu0 %v439
          %v443 = vpop.xlane.xlu0 %442
          %v444 = vadd.f32 %v436, %v441
          %v445 = vadd.f32 %v437, %v443
          %vm446 = vcmask 7168
          %447 = vst.msk [vmem:[#allocation4] sm:$0xff] %vm446, %v444
          %448 = vst.msk [vmem:[#allocation4 + $0x8] sm:$0xff] %vm446, %v445
          %v449 = vld [vmem:[#allocation2] sm:$0xff]
          %v450 = vld [vmem:[#allocation2 + $0x8] sm:$0xff]
          %451 = vmax.xlane.f32.xlu0 %v434
          %v452 = vpop.xlane.xlu0 %451
          %453 = vmax.xlane.f32.xlu0 %v435
          %v454 = vpop.xlane.xlu0 %453
          %v455 = vmax.f32 %v449, %v452
          %v456 = vmax.f32 %v450, %v454
          %v457 = vsub.f32 %v449, %v455
          %v458 = vsub.f32 %v450, %v456
          %v459 = vmul.f32 %v457, 1.442695
          %v460 = vpow.pop %v459
          %v461 = vmul.f32 %v458, 1.442695
          %v462 = vpow.pop %v461
          %464 = vset.pattern.permute.xlu0 0
          %465 = vperm.xlu0 %464, %v455
          %v466 = vpop.permute.xlu0 %465
          %469 = vset.pattern.permute.xlu0 0
          %470 = vperm.xlu0 %469, %v456
          %v471 = vpop.permute.xlu0 %470
          %v473 = vsub.f32 %v434, %v466
          %v474 = vsub.f32 %v435, %v471
          %v475 = vmul.f32 %v473, 1.442695
          %v476 = vpow.pop %v475
          %v477 = vmul.f32 %v474, 1.442695
          %v478 = vpow.pop %v477
          %v479 = vld [vmem:[#allocation3] sm:$0xff]
          %v480 = vld [vmem:[#allocation3 + $0x8] sm:$0xff]
          %v481 = vmul.f32 %v460, %v479
          %v482 = vmul.f32 %v462, %v480
          %483 = vadd.xlane.f32.xlu0 %v476
          %v484 = vpop.xlane.xlu0 %483
          %485 = vadd.xlane.f32.xlu0 %v478
          %v486 = vpop.xlane.xlu0 %485
          %v487 = vadd.f32 %v481, %v484
          %v488 = vadd.f32 %v482, %v486
          %489 = vst.msk [vmem:[#allocation3] sm:$0xff] %vm446, %v487
          %490 = vst.msk [vmem:[#allocation3 + $0x8] sm:$0xff] %vm446, %v488
          %491 = vst.msk [vmem:[#allocation2] sm:$0xff] %vm446, %v455
          %492 = vst.msk [vmem:[#allocation2 + $0x8] sm:$0xff] %vm446, %v456
          %v493 = vld [vmem:[#allocation2] sm:$0xff]
          %v494 = vld [vmem:[#allocation2 + $0x8] sm:$0xff]
          %v495 = vld [vmem:[#allocation3] sm:$0xff]
          %v496 = vld [vmem:[#allocation3 + $0x8] sm:$0xff]
          %v497 = vlog2.pop %v495
          %v498 = vmul.f32 %v497, 0.6931472
          %v499 = vlog2.pop %v496
          %v500 = vmul.f32 %v499, 0.6931472
          %v501 = vadd.f32 %v493, %v498
          %v502 = vadd.f32 %v494, %v500
          %v503 = vld [vmem:[#allocation4] sm:$0xff]
          %v504 = vld [vmem:[#allocation4 + $0x8] sm:$0xff]
          %v505 = vsub.f32 %v501, %v503
          %v506 = vsub.f32 %v502, %v504
          %507 = vst.msk [vmem:[%s247] sm:$0xff] %vm446, %v505
          %508 = vst.msk [vmem:[%s247 + $0x8] sm:$0xff] %vm446, %v506
        $region48: #{tpu_custom_call.1} parent=31 // pred_fallthru
          _
        %s509 = smul.u32 2, %s21
        %p510 = scmp.lt.s32.totalorder %s509, 1
        %s511 = scalar_select %p510, %s509, 1
        %s512 = smul.addr %s511, 8
        %s513 = scalar_lea.vmem %s3, %s512
        // Predicated region
        $region49: #{tpu_custom_call.1} parent=31 // pred_check
          %p514 = pneg %p125
        $region50: #{tpu_custom_call.1} parent=31 // pred_check_branch
          %516 = sbr.rel (%p514) target = $region52
        $region51: #{tpu_custom_call.1} parent=31 // pred_region
          %s517 = smul.u32 2, %s21
        $region52: #{tpu_custom_call.1} parent=31 // pred_fallthru
          _
        // Predicated region
        $region53: #{tpu_custom_call.1} parent=31 // pred_check
          %p518 = pneg %p125
        $region54: #{tpu_custom_call.1} parent=31 // pred_check_branch
          %520 = sbr.rel (%p518) target = $region56
        $region55: #{tpu_custom_call.1} parent=31 // pred_region
          %s521 = smul.u32 2, %s21
          %p522 = scmp.lt.s32.totalorder %s521, 1
          %s523 = scalar_select %p522, %s521, 1
          %s524 = smul.addr %s523, 8
          %s525 = scalar_lea.vmem %s3, %s524
        $region56: #{tpu_custom_call.1} parent=31 // pred_fallthru
          _
      $region32: #{tpu_custom_call.1} parent=5 // pred_fallthru
        _
      %p526 = scmp.le.s32.totalorder 2, %s12
      // Predicated region
      $region57: #{tpu_custom_call.1} parent=5 // pred_check
        %p527 = pneg %p526
      $region58: #{tpu_custom_call.1} parent=5 // pred_check_branch
        %529 = sbr.rel (%p527) target = $region60
      $region59: #{tpu_custom_call.1} parent=5 // pred_region
        %s530 = ssub.s32 %s12, 2
      $region60: #{tpu_custom_call.1} parent=5 // pred_fallthru
        _
    $region6: #{tpu_custom_call.1} parent=1 // loop_footer
      %s16 = sadd.s32 1, %s12
    $region7: #{tpu_custom_call.1} parent=1 // loop_footer_branch
      %11 = sbr.rel target = $region3
    $region8: #{tpu_custom_call.1} parent=1 // loop_exit
      _
    %531 = vsyncpa [#allocation6], 1
    %s532 = scalar_lea.sflag [#allocation6], 1
    %533 = vsyncpa %s532, 1

</llo_original>
